<compile_context>
chip_gen: v5e
topology: v5e:2x2
jax: 0.10.0
libtpu: 0.0.40
codegen_flags: <defaults>
</compile_context>

<pallas_src>
import functools

import jax
import jax.numpy as jnp
from jax.experimental import pallas as pl
from jax.experimental.pallas import tpu as pltpu


def _round_up(x, m):
    return ((x + m - 1) // m) * m


def _chip_config():
    """Per-chip VMEM budget / tile snap / softmax dtype."""
    kind = ""
    try:
        kind = jax.devices()[0].device_kind.lower()
    except Exception:
        pass
    if "v7" in kind:      # 64 MiB VMEM per TensorCore
        return dict(budget=36 << 20, vmem_limit=48 << 20, snap=256,
                    sm_dtype=jnp.bfloat16)
    if "v6" in kind:      # 128 MiB VMEM
        return dict(budget=80 << 20, vmem_limit=100 << 20, snap=256,
                    sm_dtype=jnp.bfloat16)
    if "v5" in kind:      # v5e/v5p: 128 MiB VMEM, no bf16 VPU/EUP on v5e
        return dict(budget=80 << 20, vmem_limit=100 << 20, snap=128,
                    sm_dtype=jnp.float32)
    # Unknown chip: conservative, safe defaults.
    return dict(budget=24 << 20, vmem_limit=None, snap=128,
                sm_dtype=jnp.float32)


def _select_tile(T_q, T_kp, Dq, Dk, U, Dop, H, sm_bytes, out_bytes,
                 budget, snap, max_tq):
    """Largest query tile whose live VMEM footprint fits the per-chip budget."""
    fixed = (
        4 * U * T_kp                              # kh + vh scratch (bf16)
        + 8 * Dk * T_kp                           # K,V input blocks, 2x double-buffered, bf16
        + 2 * (Dq * U + 2 * Dk * U + U * Dop) * 2 # weights, double-buffered, bf16
        + (2 << 20)                               # slack for compiler internals / bias
    )
    per_row = (
        H * T_kp * 4                              # scores s (f32)
        + 2 * H * T_kp * sm_bytes                 # e and p (softmax dtype)
        + H * T_kp * 4                            # one extra f32 temp (avg accumulate)
        + 2 * Dq * 2                              # q input block (2 buffers, bf16)
        + 2 * Dop * out_bytes                     # out block (2 buffers)
        + 2 * T_kp * 4                            # avg block (2 buffers, f32)
        + U * 12                                  # q_proj f32 + qh bf16 + o f32 + concat bf16
    )

    def fits(t):
        return fixed + t * per_row <= budget

    tq = min(_round_up(T_q, 8), max_tq)
    while tq > 8 and not fits(tq):
        if tq > snap:
            # drop to the next lower multiple of `snap` (MXU-aligned M dim)
            tq = max(snap, (tq - 1) // snap * snap)
        else:
            tq = max(8, tq // 2)
    return max(8, tq)


def _mha_kernel(q_ref, kt_ref, vt_ref, wq_ref, wkt_ref, wvt_ref, wo_ref,
                bo_ref, bias_ref, out_ref, avg_ref, kh_ref, vh_ref,
                *, num_heads, apply_bias, sm_dtype):
    H = num_heads
    d = kh_ref.shape[1]
    T_kp = kh_ref.shape[2]
    U = H * d

    # --- K/V projections: cached once per (batch, outer query split) in VMEM.
    #     program_id(2) is the innermost "arbitrary" query axis, so it runs
    #     0..nqi-1 sequentially for each (b, jo) handled by a core. ---
    @pl.when(pl.program_id(2) == 0)
    def _():
        kt = kt_ref[0]                                          # (Dk, T_kp) bf16
        vt = vt_ref[0]
        # W^T @ x^T gives the projection already transposed: lane-dense
        # (U, T_kp) with T_kp (multiple of 128) on the minor axis.
        kh = jnp.dot(wkt_ref[...], kt, preferred_element_type=jnp.float32)
        vh = jnp.dot(wvt_ref[...], vt, preferred_element_type=jnp.float32)
        kh_ref[...] = kh.reshape(H, d, T_kp).astype(kh_ref.dtype)
        vh_ref[...] = vh.reshape(H, d, T_kp).astype(vh_ref.dtype)

    # --- Q projection for this query tile (1/sqrt(key_dim) folded into W_q). ---
    q = q_ref[0]                                                # (TQ, Dq) bf16
    q_proj = jnp.dot(q, wq_ref[...], preferred_element_type=jnp.float32)  # (TQ, U)
    tq = q_proj.shape[0]
    qh = pltpu.einshape("qhd->hqd",
                        q_proj.reshape(tq, H, d)).astype(jnp.bfloat16)    # (H, TQ, d)

    kh = kh_ref[...]                                            # (H, d, T_kp) bf16
    vh = vh_ref[...]

    # --- heads-batched attention: per-head [TQ,d] x [d,T_kp] (no transposes). ---
    s = jnp.einsum("hqd,hdk->hqk", qh, kh,
                   preferred_element_type=jnp.float32)          # (H, TQ, T_kp) f32

    if apply_bias:
        # additive padding bias: 0 for valid key columns, -1e30 for padding
        s = s + bias_ref[...].reshape(1, 1, T_kp)
    # TODO(synk): runtime key_padding_mask would fold into this same bias.

    # numerically-stable softmax; shift + masking stay in f32, then the tail
    # (exp / reciprocal-multiply) runs in sm_dtype (bf16 on v6e/v7x).
    s = s - jnp.max(s, axis=-1, keepdims=True)
    e = jnp.exp(s.astype(sm_dtype))                             # (H, TQ, T_kp)
    denom = jnp.sum(e, axis=-1, keepdims=True).astype(jnp.float32)
    inv = pl.reciprocal(denom, approx=True).astype(sm_dtype)    # EUP slot
    p = e * inv

    o = jnp.einsum("hqk,hdk->hqd", p.astype(jnp.bfloat16), vh,
                   preferred_element_type=jnp.float32)          # (H, TQ, d)
    # back to (TQ, U) in torch.cat-of-splits head order
    concat = pltpu.einshape("hqd->qhd", o).reshape(tq, U)

    out = jnp.dot(concat.astype(jnp.bfloat16), wo_ref[...],
                  preferred_element_type=jnp.float32) + bo_ref[...]
    out_ref[0] = out.astype(out_ref.dtype)
    # avg over heads accumulated in f32
    avg_ref[0] = (jnp.sum(p.astype(jnp.float32), axis=0) * (1.0 / H)
                  ).astype(avg_ref.dtype)


def my_multi_head_attention(query, key, value, wq, wk, wv, wo, bo,
                            *, num_heads, key_dim, max_tq=512):
    N, T_q, Dq = query.shape
    _, T_k, Dk = key.shape
    U = wq.shape[1]
    Do = wo.shape[1]
    assert U % num_heads == 0
    d_head = U // num_heads
    out_dtype = query.dtype

    cfg = _chip_config()
    sm_dtype = cfg["sm_dtype"]
    sm_bytes = 2 if sm_dtype == jnp.bfloat16 else 4
    out_bytes = jnp.dtype(out_dtype).itemsize

    # Lane-dense stores: pad T_k and output_dim to multiples of 128.
    T_kp = _round_up(T_k, 128)
    Dop = _round_up(Do, 128)

    TQ = _select_tile(T_q, T_kp, Dq, Dk, U, Dop, num_heads, sm_bytes, out_bytes,
                      cfg["budget"], cfg["snap"], max_tq)
    T_qp = _round_up(T_q, TQ)
    nq = T_qp // TQ
    # Second "parallel" axis over query tiles keeps both v7x TensorCores busy
    # when the batch alone can't; K/V projection is recomputed per outer index.
    nqo = 2 if (N < 4 and nq >= 2 and nq % 2 == 0) else 1
    nqi = nq // nqo

    # bf16 operands for every MXU matmul (f32 accumulation in-kernel).
    # Fold the 1/sqrt(key_dim) score scale into W_query (once, outside).
    scale = 1.0 / (float(key_dim) ** 0.5)
    q_p = query if T_qp == T_q else jnp.pad(query, ((0, 0), (0, T_qp - T_q), (0, 0)))
    q_p = q_p.astype(jnp.bfloat16)

    # key/value passed transposed: (N, Dk, T_kp) so the kernel's K/V caches
    # come out lane-dense with no in-kernel transpose.
    kT = jnp.swapaxes(key, 1, 2)
    vT = jnp.swapaxes(value, 1, 2)
    if T_kp != T_k:
        kT = jnp.pad(kT, ((0, 0), (0, 0), (0, T_kp - T_k)))
        vT = jnp.pad(vT, ((0, 0), (0, 0), (0, T_kp - T_k)))
    kT = kT.astype(jnp.bfloat16)
    vT = vT.astype(jnp.bfloat16)

    wq_b = (wq.astype(jnp.float32) * scale).astype(jnp.bfloat16)   # (Dq, U)
    wkT = wk.T.astype(jnp.bfloat16)                                # (U, Dk)
    wvT = wv.T.astype(jnp.bfloat16)                                # (U, Dk)
    wo_b = (wo if Dop == Do else jnp.pad(wo, ((0, 0), (0, Dop - Do)))
            ).astype(jnp.bfloat16)                                 # (U, Dop)
    bo_p = (bo if Dop == Do else jnp.pad(bo, (0, Dop - Do))
            ).astype(jnp.float32).reshape(1, Dop)

    # Additive padding-mask bias row (only applied when T_k is not 128-aligned).
    apply_bias = T_kp != T_k
    key_bias = jnp.where(jnp.arange(T_kp) < T_k, 0.0, -1e30
                         ).astype(jnp.float32).reshape(1, T_kp)

    kernel = functools.partial(_mha_kernel, num_heads=num_heads,
                               apply_bias=apply_bias, sm_dtype=sm_dtype)

    out, avg = pl.pallas_call(
        kernel,
        out_shape=(
            jax.ShapeDtypeStruct((N, T_qp, Dop), out_dtype),
            jax.ShapeDtypeStruct((N, T_qp, T_kp), jnp.float32),
        ),
        grid_spec=pltpu.PrefetchScalarGridSpec(
            num_scalar_prefetch=0,
            grid=(N, nqo, nqi),
            in_specs=[
                pl.BlockSpec((1, TQ, Dq), lambda b, jo, ji: (b, jo * nqi + ji, 0)),
                pl.BlockSpec((1, Dk, T_kp), lambda b, jo, ji: (b, 0, 0)),   # key^T
                pl.BlockSpec((1, Dk, T_kp), lambda b, jo, ji: (b, 0, 0)),   # value^T
                pl.BlockSpec((Dq, U), lambda b, jo, ji: (0, 0)),            # W_query (pre-scaled)
                pl.BlockSpec((U, Dk), lambda b, jo, ji: (0, 0)),            # W_key^T
                pl.BlockSpec((U, Dk), lambda b, jo, ji: (0, 0)),            # W_value^T
                pl.BlockSpec((U, Dop), lambda b, jo, ji: (0, 0)),           # W_output (padded)
                pl.BlockSpec((1, Dop), lambda b, jo, ji: (0, 0)),           # b_output (padded)
                pl.BlockSpec((1, T_kp), lambda b, jo, ji: (0, 0)),          # padding bias row
            ],
            out_specs=[
                pl.BlockSpec((1, TQ, Dop), lambda b, jo, ji: (b, jo * nqi + ji, 0)),
                pl.BlockSpec((1, TQ, T_kp), lambda b, jo, ji: (b, jo * nqi + ji, 0)),
            ],
            scratch_shapes=[
                pltpu.VMEM((num_heads, d_head, T_kp), jnp.bfloat16),  # cached K^T proj
                pltpu.VMEM((num_heads, d_head, T_kp), jnp.bfloat16),  # cached V^T proj
            ],
        ),
        compiler_params=pltpu.CompilerParams(
            dimension_semantics=("parallel", "parallel", "arbitrary"),
            vmem_limit_bytes=cfg["vmem_limit"],
        ),
    )(q_p, kT, vT, wq_b, wkT, wvT, wo_b, bo_p, key_bias)

    # Conditional slicing: no-ops when shapes were already aligned.
    if T_qp != T_q or Dop != Do:
        out = out[:, :T_q, :Do]
    if T_qp != T_q or T_kp != T_k:
        avg = avg[:, :T_q, :T_k]
    return out, avg


def _reference(query, key, value, wq, wk, wv, wo, bo, *, num_heads, key_dim):
    # pure-JAX (f32) reference mirroring the PyTorch forward
    Q = query @ wq
    K = key @ wk
    V = value @ wv

    def split_heads(x):  # [N,T,U] -> [h,N,T,d]
        return jnp.stack(jnp.split(x, num_heads, axis=2), axis=0)

    Qh, Kh, Vh = split_heads(Q), split_heads(K), split_heads(V)
    s = jnp.einsum('hnqd,hnkd->hnqk', Qh, Kh) / (float(key_dim) ** 0.5)
    p = jax.nn.softmax(s, axis=3)
    o = jnp.einsum('hnqk,hnkd->hnqd', p, Vh)
    o = jnp.concatenate(jnp.split(o, num_heads, axis=0), axis=3)[0]
    out = o @ wo + bo
    return out, p.mean(axis=0)


if __name__ == "__main__":
    # Small shapes consistent with the module; T_k not 128-aligned exercises
    # the padding-bias path, max_tq=8 exercises multi-tile grid + the second
    # parallel query axis + K/V cache reuse.
    N, T_q, T_k = 2, 32, 24
    query_dim, key_dim = 16, 16
    num_units, num_heads, output_dim = 32, 4, 16

    root = jax.random.PRNGKey(0)
    ks = jax.random.split(root, 8)
    query = jax.random.normal(ks[0], (N, T_q, query_dim), jnp.float32)
    key = jax.random.normal(ks[1], (N, T_k, key_dim), jnp.float32)
    value = jax.random.normal(ks[2], (N, T_k, key_dim), jnp.float32)

    # Deterministic parameter init (shapes from __init__, [in, out] layout).
    wq = jax.random.normal(ks[3], (query_dim, num_units), jnp.float32) * 0.1
    wk = jax.random.normal(ks[4], (key_dim, num_units), jnp.float32) * 0.1
    wv = jax.random.normal(ks[5], (key_dim, num_units), jnp.float32) * 0.1
    wo = jax.random.normal(ks[6], (num_units, output_dim), jnp.float32) * 0.1
    bo = jax.random.normal(ks[7], (output_dim,), jnp.float32) * 0.1

    out, avg = my_multi_head_attention(
        query, key, value, wq, wk, wv, wo, bo,
        num_heads=num_heads, key_dim=key_dim, max_tq=8)
    jax.block_until_ready((out, avg))

    ref_out, ref_avg = _reference(
        query, key, value, wq, wk, wv, wo, bo,
        num_heads=num_heads, key_dim=key_dim)

    # bf16 matmuls (+ bf16 softmax tail on v6e/v7x, approx reciprocal) =>
    # slightly looser tolerances than a pure-f32 implementation.
    assert out.shape == ref_out.shape and avg.shape == ref_avg.shape
    assert jnp.allclose(out, ref_out, atol=3e-2, rtol=3e-2), (
        float(jnp.max(jnp.abs(out - ref_out))))
    assert jnp.allclose(avg, ref_avg, atol=1e-2), (
        float(jnp.max(jnp.abs(avg - ref_avg))))

    print("KERNEL_OK")
</pallas_src>

<mosaic_0001>
module attributes {stable_mosaic.version = 11 : i64} {
  func.func @_mha_kernel(%arg0: i32, %arg1: i32, %arg2: i32, %arg3: memref<1x8x16xbf16, #tpu.memory_space<vmem>>, %arg4: memref<1x16x128xbf16, #tpu.memory_space<vmem>>, %arg5: memref<1x16x128xbf16, #tpu.memory_space<vmem>>, %arg6: memref<16x32xbf16, #tpu.memory_space<vmem>>, %arg7: memref<32x16xbf16, #tpu.memory_space<vmem>>, %arg8: memref<32x16xbf16, #tpu.memory_space<vmem>>, %arg9: memref<32x128xbf16, #tpu.memory_space<vmem>>, %arg10: memref<1x128xf32, #tpu.memory_space<vmem>>, %arg11: memref<1x128xf32, #tpu.memory_space<vmem>>, %arg12: memref<1x8x128xf32, #tpu.memory_space<vmem>>, %arg13: memref<1x8x128xf32, #tpu.memory_space<vmem>>, %arg14: memref<4x8x128xbf16, #tpu.memory_space<vmem>>, %arg15: memref<4x8x128xbf16, #tpu.memory_space<vmem>>) attributes {dimension_semantics = [#tpu.dimension_semantics<parallel>, #tpu.dimension_semantics<parallel>, #tpu.dimension_semantics<arbitrary>], iteration_bounds = array<i64: 2, 2, 2>, scalar_prefetch = 0 : i64, scratch_operands = 2 : i64, tpu.core_type = #tpu.core_type<tc>, window_params = [{transform_indices = @transform_0, window_bounds = array<i64: 1, 8, 16>}, {transform_indices = @transform_1, window_bounds = array<i64: 1, 16, 128>}, {transform_indices = @transform_2, window_bounds = array<i64: 1, 16, 128>}, {pipeline_mode = #tpu.pipeline_mode<synchronous>, transform_indices = @transform_3, window_bounds = array<i64: 16, 32>}, {pipeline_mode = #tpu.pipeline_mode<synchronous>, transform_indices = @transform_4, window_bounds = array<i64: 32, 16>}, {pipeline_mode = #tpu.pipeline_mode<synchronous>, transform_indices = @transform_5, window_bounds = array<i64: 32, 16>}, {pipeline_mode = #tpu.pipeline_mode<synchronous>, transform_indices = @transform_6, window_bounds = array<i64: 32, 128>}, {pipeline_mode = #tpu.pipeline_mode<synchronous>, transform_indices = @transform_7, window_bounds = array<i64: 1, 128>}, {pipeline_mode = #tpu.pipeline_mode<synchronous>, transform_indices = @transform_8, window_bounds = array<i64: 1, 128>}, {transform_indices = @transform_9, window_bounds = array<i64: 1, 8, 128>}, {transform_indices = @transform_10, window_bounds = array<i64: 1, 8, 128>}]} {
    %c0_i32 = arith.constant 0 : i32
    %0 = arith.cmpi eq, %arg2, %c0_i32 : i32
    %1 = arith.extui %0 : i1 to i32
    %c0_i32_0 = arith.constant 0 : i32
    %2 = arith.cmpi ne, %1, %c0_i32_0 : i32
    scf.if %2 {
      %c0_30 = arith.constant 0 : index
      %c0_31 = arith.constant 0 : index
      %c0_32 = arith.constant 0 : index
      %46 = vector.load %arg4[%c0_30, %c0_31, %c0_32] : memref<1x16x128xbf16, #tpu.memory_space<vmem>>, vector<1x16x128xbf16>
      %47 = vector.shape_cast %46 : vector<1x16x128xbf16> to vector<16x128xbf16>
      %c0_33 = arith.constant 0 : index
      %c0_34 = arith.constant 0 : index
      %c0_35 = arith.constant 0 : index
      %48 = vector.load %arg5[%c0_33, %c0_34, %c0_35] : memref<1x16x128xbf16, #tpu.memory_space<vmem>>, vector<1x16x128xbf16>
      %49 = vector.shape_cast %48 : vector<1x16x128xbf16> to vector<16x128xbf16>
      %c0_36 = arith.constant 0 : index
      %c0_37 = arith.constant 0 : index
      %50 = vector.load %arg7[%c0_36, %c0_37] : memref<32x16xbf16, #tpu.memory_space<vmem>>, vector<32x16xbf16>
      %cst_38 = arith.constant dense<0.000000e+00> : vector<32x128xf32>
      %51 = tpu.matmul %50, %47, %cst_38 {dimension_numbers = #tpu.dot_dimension_numbers<[1], [0], [0], [1], [0, 0, 1, 1], [], []>} : vector<32x16xbf16>, vector<16x128xbf16>, vector<32x128xf32> -> vector<32x128xf32>
      %c0_39 = arith.constant 0 : index
      %c0_40 = arith.constant 0 : index
      %52 = vector.load %arg8[%c0_39, %c0_40] : memref<32x16xbf16, #tpu.memory_space<vmem>>, vector<32x16xbf16>
      %cst_41 = arith.constant dense<0.000000e+00> : vector<32x128xf32>
      %53 = tpu.matmul %52, %49, %cst_41 {dimension_numbers = #tpu.dot_dimension_numbers<[1], [0], [0], [1], [0, 0, 1, 1], [], []>} : vector<32x16xbf16>, vector<16x128xbf16>, vector<32x128xf32> -> vector<32x128xf32>
      %54 = vector.shape_cast %51 : vector<32x128xf32> to vector<4x8x128xf32>
      %55 = arith.truncf %54 : vector<4x8x128xf32> to vector<4x8x128xbf16>
      %c0_42 = arith.constant 0 : index
      %c0_43 = arith.constant 0 : index
      %c0_44 = arith.constant 0 : index
      %56 = vector.load %arg14[%c0_42, %c0_43, %c0_44] : memref<4x8x128xbf16, #tpu.memory_space<vmem>>, vector<4x8x128xbf16>
      tpu.vector_store %arg14[%c0_42, %c0_43, %c0_44], %55 {strides = array<i32>} : memref<4x8x128xbf16, #tpu.memory_space<vmem>>, vector<4x8x128xbf16>,
      %57 = vector.shape_cast %53 : vector<32x128xf32> to vector<4x8x128xf32>
      %58 = arith.truncf %57 : vector<4x8x128xf32> to vector<4x8x128xbf16>
      %c0_45 = arith.constant 0 : index
      %c0_46 = arith.constant 0 : index
      %c0_47 = arith.constant 0 : index
      %59 = vector.load %arg15[%c0_45, %c0_46, %c0_47] : memref<4x8x128xbf16, #tpu.memory_space<vmem>>, vector<4x8x128xbf16>
      tpu.vector_store %arg15[%c0_45, %c0_46, %c0_47], %58 {strides = array<i32>} : memref<4x8x128xbf16, #tpu.memory_space<vmem>>, vector<4x8x128xbf16>,
    } else {
    }
    %c0 = arith.constant 0 : index
    %c0_1 = arith.constant 0 : index
    %c0_2 = arith.constant 0 : index
    %3 = vector.load %arg3[%c0, %c0_1, %c0_2] : memref<1x8x16xbf16, #tpu.memory_space<vmem>>, vector<1x8x16xbf16>
    %4 = vector.shape_cast %3 : vector<1x8x16xbf16> to vector<8x16xbf16>
    %c0_3 = arith.constant 0 : index
    %c0_4 = arith.constant 0 : index
    %5 = vector.load %arg6[%c0_3, %c0_4] : memref<16x32xbf16, #tpu.memory_space<vmem>>, vector<16x32xbf16>
    %cst = arith.constant dense<0.000000e+00> : vector<8x32xf32>
    %6 = tpu.matmul %4, %5, %cst {dimension_numbers = #tpu.dot_dimension_numbers<[1], [0], [0], [1], [0, 0, 1, 1], [], []>} : vector<8x16xbf16>, vector<16x32xbf16>, vector<8x32xf32> -> vector<8x32xf32>
    %7 = vector.shape_cast %6 : vector<8x32xf32> to vector<8x4x8xf32>
    %8 = tpu.transpose %7, [1, 0, 2] : vector<8x4x8xf32> -> vector<4x8x8xf32>
    %9 = arith.truncf %8 : vector<4x8x8xf32> to vector<4x8x8xbf16>
    %c0_5 = arith.constant 0 : index
    %c0_6 = arith.constant 0 : index
    %c0_7 = arith.constant 0 : index
    %10 = vector.load %arg14[%c0_5, %c0_6, %c0_7] : memref<4x8x128xbf16, #tpu.memory_space<vmem>>, vector<4x8x128xbf16>
    %c0_8 = arith.constant 0 : index
    %c0_9 = arith.constant 0 : index
    %c0_10 = arith.constant 0 : index
    %11 = vector.load %arg15[%c0_8, %c0_9, %c0_10] : memref<4x8x128xbf16, #tpu.memory_space<vmem>>, vector<4x8x128xbf16>
    "tpu.trace_start"() <{level = 10 : i32, message = "hqd,hdk->hqk"}> : () -> ()
    %cst_11 = arith.constant dense<0.000000e+00> : vector<4x8x128xf32>
    %12 = tpu.matmul %9, %10, %cst_11 {dimension_numbers = #tpu.dot_dimension_numbers<[2], [1], [1], [2], [0, 0, 0, 1, 1, 2], [0], [0]>} : vector<4x8x8xbf16>, vector<4x8x128xbf16>, vector<4x8x128xf32> -> vector<4x8x128xf32>
    "tpu.trace_stop"() : () -> ()
    %c0_12 = arith.constant 0 : index
    %c0_13 = arith.constant 0 : index
    %13 = vector.load %arg11[%c0_12, %c0_13] : memref<1x128xf32, #tpu.memory_space<vmem>>, vector<1x128xf32>
    %14 = vector.shape_cast %13 : vector<1x128xf32> to vector<1x1x128xf32>
    %15 = vector.broadcast %14 : vector<1x1x128xf32> to vector<4x8x128xf32>
    %16 = arith.addf %12, %15 : vector<4x8x128xf32>
    %cst_14 = arith.constant dense<0xFF800000> : vector<4x8xf32>
    %17 = vector.multi_reduction <maximumf>, %16, %cst_14 [2] : vector<4x8x128xf32> to vector<4x8xf32>
    %18 = vector.shape_cast %17 : vector<4x8xf32> to vector<4x8x1xf32>
    %19 = vector.broadcast %18 : vector<4x8x1xf32> to vector<4x8x128xf32>
    %20 = arith.subf %16, %19 : vector<4x8x128xf32>
    %21 = math.exp %20 : vector<4x8x128xf32>
    %cst_15 = arith.constant dense<0.000000e+00> : vector<4x8xf32>
    %22 = vector.multi_reduction <add>, %21, %cst_15 [2] : vector<4x8x128xf32> to vector<4x8xf32>
    %23 = vector.shape_cast %22 : vector<4x8xf32> to vector<4x8x1xf32>
    %24 = tpu.reciprocal %23 {approx = true} : vector<4x8x1xf32> -> vector<4x8x1xf32>
    %25 = vector.broadcast %24 : vector<4x8x1xf32> to vector<4x8x128xf32>
    %26 = arith.mulf %21, %25 : vector<4x8x128xf32>
    %27 = arith.truncf %26 : vector<4x8x128xf32> to vector<4x8x128xbf16>
    "tpu.trace_start"() <{level = 10 : i32, message = "hqk,hdk->hqd"}> : () -> ()
    %cst_16 = arith.constant dense<0.000000e+00> : vector<4x8x8xf32>
    %28 = tpu.matmul %27, %11, %cst_16 {dimension_numbers = #tpu.dot_dimension_numbers<[2], [2], [1], [1], [0, 0, 0, 1, 1, 1], [0], [0]>} : vector<4x8x128xbf16>, vector<4x8x128xbf16>, vector<4x8x8xf32> -> vector<4x8x8xf32>
    "tpu.trace_stop"() : () -> ()
    %29 = tpu.transpose %28, [1, 0, 2] : vector<4x8x8xf32> -> vector<8x4x8xf32>
    %30 = vector.shape_cast %29 : vector<8x4x8xf32> to vector<8x32xf32>
    %31 = arith.truncf %30 : vector<8x32xf32> to vector<8x32xbf16>
    %c0_17 = arith.constant 0 : index
    %c0_18 = arith.constant 0 : index
    %32 = vector.load %arg9[%c0_17, %c0_18] : memref<32x128xbf16, #tpu.memory_space<vmem>>, vector<32x128xbf16>
    %cst_19 = arith.constant dense<0.000000e+00> : vector<8x128xf32>
    %33 = tpu.matmul %31, %32, %cst_19 {dimension_numbers = #tpu.dot_dimension_numbers<[1], [0], [0], [1], [0, 0, 1, 1], [], []>} : vector<8x32xbf16>, vector<32x128xbf16>, vector<8x128xf32> -> vector<8x128xf32>
    %c0_20 = arith.constant 0 : index
    %c0_21 = arith.constant 0 : index
    %34 = vector.load %arg10[%c0_20, %c0_21] : memref<1x128xf32, #tpu.memory_space<vmem>>, vector<1x128xf32>
    %35 = vector.broadcast %34 : vector<1x128xf32> to vector<8x128xf32>
    %36 = arith.addf %33, %35 : vector<8x128xf32>
    %c0_22 = arith.constant 0 : index
    %c0_23 = arith.constant 0 : index
    %c0_24 = arith.constant 0 : index
    %37 = vector.load %arg12[%c0_22, %c0_23, %c0_24] : memref<1x8x128xf32, #tpu.memory_space<vmem>>, vector<1x8x128xf32>
    %38 = vector.shape_cast %37 : vector<1x8x128xf32> to vector<8x128xf32>
    %39 = vector.shape_cast %36 : vector<8x128xf32> to vector<1x8x128xf32>
    tpu.vector_store %arg12[%c0_22, %c0_23, %c0_24], %39 {strides = array<i32>} : memref<1x8x128xf32, #tpu.memory_space<vmem>>, vector<1x8x128xf32>,
    %cst_25 = arith.constant dense<0.000000e+00> : vector<8x128xf32>
    %40 = vector.multi_reduction <add>, %26, %cst_25 [0] : vector<4x8x128xf32> to vector<8x128xf32>
    %cst_26 = arith.constant 2.500000e-01 : f32
    %41 = vector.broadcast %cst_26 : f32 to vector<8x128xf32>
    %42 = arith.mulf %40, %41 : vector<8x128xf32>
    %c0_27 = arith.constant 0 : index
    %c0_28 = arith.constant 0 : index
    %c0_29 = arith.constant 0 : index
    %43 = vector.load %arg13[%c0_27, %c0_28, %c0_29] : memref<1x8x128xf32, #tpu.memory_space<vmem>>, vector<1x8x128xf32>
    %44 = vector.shape_cast %43 : vector<1x8x128xf32> to vector<8x128xf32>
    %45 = vector.shape_cast %42 : vector<8x128xf32> to vector<1x8x128xf32>
    tpu.vector_store %arg13[%c0_27, %c0_28, %c0_29], %45 {strides = array<i32>} : memref<1x8x128xf32, #tpu.memory_space<vmem>>, vector<1x8x128xf32>,
    return
  }
  func.func @transform_0(%arg0: i32, %arg1: i32, %arg2: i32) -> (i32, i32, i32) {
    %c2_i32 = arith.constant 2 : i32
    %0 = arith.muli %arg1, %c2_i32 : i32
    %1 = arith.addi %0, %arg2 : i32
    %c0_i32 = arith.constant 0 : i32
    %c0_i32_0 = arith.constant 0 : i32
    return %arg0, %1, %c0_i32 : i32, i32, i32
  }
  func.func @transform_1(%arg0: i32, %arg1: i32, %arg2: i32) -> (i32, i32, i32) {
    %c0_i32 = arith.constant 0 : i32
    %c0_i32_0 = arith.constant 0 : i32
    %c0_i32_1 = arith.constant 0 : i32
    return %arg0, %c0_i32, %c0_i32_0 : i32, i32, i32
  }
  func.func @transform_2(%arg0: i32, %arg1: i32, %arg2: i32) -> (i32, i32, i32) {
    %c0_i32 = arith.constant 0 : i32
    %c0_i32_0 = arith.constant 0 : i32
    %c0_i32_1 = arith.constant 0 : i32
    return %arg0, %c0_i32, %c0_i32_0 : i32, i32, i32
  }
  func.func @transform_3(%arg0: i32, %arg1: i32, %arg2: i32) -> (i32, i32) {
    %c0_i32 = arith.constant 0 : i32
    %c0_i32_0 = arith.constant 0 : i32
    %c0_i32_1 = arith.constant 0 : i32
    return %c0_i32, %c0_i32_0 : i32, i32
  }
  func.func @transform_4(%arg0: i32, %arg1: i32, %arg2: i32) -> (i32, i32) {
    %c0_i32 = arith.constant 0 : i32
    %c0_i32_0 = arith.constant 0 : i32
    %c0_i32_1 = arith.constant 0 : i32
    return %c0_i32, %c0_i32_0 : i32, i32
  }
  func.func @transform_5(%arg0: i32, %arg1: i32, %arg2: i32) -> (i32, i32) {
    %c0_i32 = arith.constant 0 : i32
    %c0_i32_0 = arith.constant 0 : i32
    %c0_i32_1 = arith.constant 0 : i32
    return %c0_i32, %c0_i32_0 : i32, i32
  }
  func.func @transform_6(%arg0: i32, %arg1: i32, %arg2: i32) -> (i32, i32) {
    %c0_i32 = arith.constant 0 : i32
    %c0_i32_0 = arith.constant 0 : i32
    %c0_i32_1 = arith.constant 0 : i32
    return %c0_i32, %c0_i32_0 : i32, i32
  }
  func.func @transform_7(%arg0: i32, %arg1: i32, %arg2: i32) -> (i32, i32) {
    %c0_i32 = arith.constant 0 : i32
    %c0_i32_0 = arith.constant 0 : i32
    %c0_i32_1 = arith.constant 0 : i32
    return %c0_i32, %c0_i32_0 : i32, i32
  }
  func.func @transform_8(%arg0: i32, %arg1: i32, %arg2: i32) -> (i32, i32) {
    %c0_i32 = arith.constant 0 : i32
    %c0_i32_0 = arith.constant 0 : i32
    %c0_i32_1 = arith.constant 0 : i32
    return %c0_i32, %c0_i32_0 : i32, i32
  }
  func.func @transform_9(%arg0: i32, %arg1: i32, %arg2: i32) -> (i32, i32, i32) {
    %c2_i32 = arith.constant 2 : i32
    %0 = arith.muli %arg1, %c2_i32 : i32
    %1 = arith.addi %0, %arg2 : i32
    %c0_i32 = arith.constant 0 : i32
    %c0_i32_0 = arith.constant 0 : i32
    return %arg0, %1, %c0_i32 : i32, i32, i32
  }
  func.func @transform_10(%arg0: i32, %arg1: i32, %arg2: i32) -> (i32, i32, i32) {
    %c2_i32 = arith.constant 2 : i32
    %0 = arith.muli %arg1, %c2_i32 : i32
    %1 = arith.addi %0, %arg2 : i32
    %c0_i32 = arith.constant 0 : i32
    %c0_i32_0 = arith.constant 0 : i32
    return %arg0, %1, %c0_i32 : i32, i32, i32
  }
}

</mosaic_0001>

<llo_original>
// kernel: tpu_custom_call.1
$region0: #{tpu_custom_call.1}
  #allocation0 [shape = 'u32[]', space=smem, size = 0x4, offset = 0x4, fixed_abs, tag = 'smem constant byte address 0x4 - core index']
  #allocation1 [shape = 'u32[72,128]{1,0:T(1,128)}', space=vmem, size = 0x9000, scoped, tag = 'internal scratch']
  #allocation2 [shape = 'bf16[4,8,128]{2,1,0:T(8,128)(2,1)}', space=vmem, size = 0x2000, scoped, tag = 'scratch operand']
  #allocation3 [shape = 'bf16[4,8,128]{2,1,0:T(8,128)(2,1)}', space=vmem, size = 0x2000, scoped, tag = 'scratch operand']
  %s0 = inlined_call_operand.vmem [shape: bf16[2,32,16], index: 0, kind: input, shape index: {}]
  %s1 = inlined_call_operand.vmem [shape: bf16[2,16,128], index: 1, kind: input, shape index: {}]
  %s2 = inlined_call_operand.vmem [shape: bf16[2,16,128], index: 2, kind: input, shape index: {}]
  %s3 = inlined_call_operand.vmem [shape: bf16[16,32], index: 3, kind: input, shape index: {}]
  %s4 = inlined_call_operand.vmem [shape: bf16[32,16], index: 4, kind: input, shape index: {}]
  %s5 = inlined_call_operand.vmem [shape: bf16[32,16], index: 5, kind: input, shape index: {}]
  %s6 = inlined_call_operand.vmem [shape: bf16[32,128], index: 6, kind: input, shape index: {}]
  %s7 = inlined_call_operand.vmem [shape: f32[1,128], index: 7, kind: input, shape index: {}]
  %s8 = inlined_call_operand.vmem [shape: f32[1,128], index: 8, kind: input, shape index: {}]
  %s9 = inlined_call_operand.hbm [shape: f32[2,32,128], index: 9, kind: output, shape index: {0}]
  %s10 = inlined_call_operand.hbm [shape: f32[2,32,128], index: 10, kind: output, shape index: {1}]
  %11 = xla_tuple %s9, %s10
  %s12 = sld [smem:[#allocation0]]
  $region81: #{tpu_custom_call.1} parent=0
    _
  %s14 = ssub.s32 1, %s12
  %s15 = scalar_select 0, %s14, %s12
  $region1: #{tpu_custom_call.1} parent=0
    #allocation4 [shape = 'u8[8192]{0}', space=vmem, size = 0x2000, scoped, tag = 'output window, operand 0']
    #allocation5 [shape = 's32[2]{0}', space=sflag, size = 0x8, scoped, tag = 'scoped memory for tpu_custom_call.1']
    #allocation6 [shape = 'u8[8192]{0}', space=vmem, size = 0x2000, scoped, tag = 'output window, operand 1']
    #allocation7 [shape = 's32[2]{0}', space=sflag, size = 0x8, scoped, tag = 'scoped memory for tpu_custom_call.1']
    %16 = vsyncpa [#allocation5], 0
    %s17 = scalar_lea.sflag [#allocation5], 1
    %18 = vsyncpa %s17, 0
    %19 = vsyncpa [#allocation7], 0
    %s20 = scalar_lea.sflag [#allocation7], 1
    %21 = vsyncpa %s20, 0
    loop: start=0, step=1, limit=10
    $region2: #{tpu_custom_call.1} parent=1 // loop_pre_header
      _
    $region3: #{tpu_custom_call.1} parent=1 // loop_header
      %s23 = sphi 0, %s27
      %p24 = scmp.ge.s32.totalorder %s23, 10
      %s30 = sphi 0, %s49
      %s31 = sphi 0, %s45
      %s32 = sphi 0, %s41
      %s33 = sphi 0, %s30
      %s34 = sphi 0, %s31
      %s35 = sphi 0, %s32
      %s36 = sphi 0, %s33
      %s37 = sphi 0, %s34
      %s38 = sphi 0, %s35
      %s58 = sphi 0, %s60
      %s61 = sphi 0, %s58
      %s62 = sphi 0, %s61
      %s78 = sphi 0, %s62
      %s84 = sphi 0, %s86
      %s87 = sphi 0, %s84
      %s88 = sphi 0, %s87
      %s104 = sphi 0, %s88
      %s110 = sphi 0, %s112
      %s113 = sphi 0, %s110
      %s114 = sphi 0, %s113
      %s130 = sphi 0, %s114
      %s134 = sphi 0, %s134
      %s136 = sphi 0, %s134
      %s137 = sphi 0, %s136
      %s151 = sphi 0, %s137
      %s155 = sphi 0, %s155
      %s157 = sphi 0, %s155
      %s158 = sphi 0, %s157
      %s172 = sphi 0, %s158
      %s176 = sphi 0, %s176
      %s178 = sphi 0, %s176
      %s179 = sphi 0, %s178
      %s193 = sphi 0, %s179
      %s197 = sphi 0, %s197
      %s199 = sphi 0, %s197
      %s200 = sphi 0, %s199
      %s214 = sphi 0, %s200
      %s218 = sphi 0, %s218
      %s220 = sphi 0, %s218
      %s221 = sphi 0, %s220
      %s235 = sphi 0, %s221
      %s239 = sphi 0, %s239
      %s241 = sphi 0, %s239
      %s242 = sphi 0, %s241
      %s256 = sphi 0, %s242
      %s268 = sphi 0, %s270
      %s271 = sphi 0, %s268
      %s272 = sphi 0, %s271
      %s288 = sphi 0, %s272
      %s300 = sphi 0, %s302
      %s303 = sphi 0, %s300
      %s304 = sphi 0, %s303
      %s320 = sphi 0, %s304
    $region4: #{tpu_custom_call.1} parent=1 // loop_header_branch
      %26 = sbr.rel (%p24) target = $region8
    $region5: #{tpu_custom_call.1} parent=1 // loop_body
      %s28 = ssub.s32 %s23, 1
      %s29 = ssub.s32 %s23, 2
      %s39 = sadd.s32 1, %s32
      %p40 = scmp.ge.s32.totalorder %s39, 2
      %s41 = scalar_select %p40, 0, %s39
      %s42 = sadd.s32 1, %s31
      %s43 = scalar_select %p40, %s42, %s31
      %p44 = scmp.ge.s32.totalorder %s43, 2
      %s45 = scalar_select %p44, 0, %s43
      %s46 = sadd.s32 1, %s30
      %s47 = scalar_select %p44, %s46, %s30
      %p48 = scmp.ge.s32.totalorder %s47, 2
      %s49 = scalar_select %p48, 0, %s47
      %s50 = smul.u32 %s31, 2
      %s51 = sadd.s32 %s50, %s32
      %s52 = smul.u32 %s45, 2
      %s53 = sadd.s32 %s52, %s41
      %s54 = ssub.s32 %s30, %s49
      %s55 = ssub.s32 %s51, %s53
      %s56 = sor.u32 %s54, %s55
      %p57 = scmp.eq.s32.totalorder %s56, 0
      %s59 = sadd.s32 %s58, 1
      %s60 = scalar_select %p57, %s58, %s59
      %p63 = pneg %p57
      %p64 = scmp.eq.s32.totalorder %s23, 7
      %p65 = por %p63, %p64
      %p66 = scmp.ne.s32.totalorder %s58, %s61
      %p67 = scmp.eq.s32.totalorder %s23, 0
      %p68 = por %p66, %p67
      %p69 = scmp.ne.s32.totalorder %s58, %s61
      %p70 = scmp.eq.s32.totalorder %s28, 7
      %p71 = por %p69, %p70
      %p72 = scmp.ne.s32.totalorder %s61, %s62
      %p73 = scmp.eq.s32.totalorder %s28, 0
      %p74 = por %p72, %p73
      %p75 = scmp.ne.s32.totalorder %s61, %s62
      %p76 = scmp.eq.s32.totalorder %s29, 7
      %p77 = por %p75, %p76
      %p79 = scmp.ne.s32.totalorder %s62, %s78
      %p80 = scmp.eq.s32.totalorder %s29, 0
      %p81 = por %p79, %p80
      %s82 = ssub.s32 %s30, %s49
      %p83 = scmp.eq.s32.totalorder %s82, 0
      %s85 = sadd.s32 %s84, 1
      %s86 = scalar_select %p83, %s84, %s85
      %p89 = pneg %p83
      %p90 = scmp.eq.s32.totalorder %s23, 7
      %p91 = por %p89, %p90
      %p92 = scmp.ne.s32.totalorder %s84, %s87
      %p93 = scmp.eq.s32.totalorder %s23, 0
      %p94 = por %p92, %p93
      %p95 = scmp.ne.s32.totalorder %s84, %s87
      %p96 = scmp.eq.s32.totalorder %s28, 7
      %p97 = por %p95, %p96
      %p98 = scmp.ne.s32.totalorder %s87, %s88
      %p99 = scmp.eq.s32.totalorder %s28, 0
      %p100 = por %p98, %p99
      %p101 = scmp.ne.s32.totalorder %s87, %s88
      %p102 = scmp.eq.s32.totalorder %s29, 7
      %p103 = por %p101, %p102
      %p105 = scmp.ne.s32.totalorder %s88, %s104
      %p106 = scmp.eq.s32.totalorder %s29, 0
      %p107 = por %p105, %p106
      %s108 = ssub.s32 %s30, %s49
      %p109 = scmp.eq.s32.totalorder %s108, 0
      %s111 = sadd.s32 %s110, 1
      %s112 = scalar_select %p109, %s110, %s111
      %p115 = pneg %p109
      %p116 = scmp.eq.s32.totalorder %s23, 7
      %p117 = por %p115, %p116
      %p118 = scmp.ne.s32.totalorder %s110, %s113
      %p119 = scmp.eq.s32.totalorder %s23, 0
      %p120 = por %p118, %p119
      %p121 = scmp.ne.s32.totalorder %s110, %s113
      %p122 = scmp.eq.s32.totalorder %s28, 7
      %p123 = por %p121, %p122
      %p124 = scmp.ne.s32.totalorder %s113, %s114
      %p125 = scmp.eq.s32.totalorder %s28, 0
      %p126 = por %p124, %p125
      %p127 = scmp.ne.s32.totalorder %s113, %s114
      %p128 = scmp.eq.s32.totalorder %s29, 7
      %p129 = por %p127, %p128
      %p131 = scmp.ne.s32.totalorder %s114, %s130
      %p132 = scmp.eq.s32.totalorder %s29, 0
      %p133 = por %p131, %p132
      %s135 = sadd.s32 %s134, 1
      %p138 = scmp.eq.s32.totalorder %s23, 7
      %p139 = scmp.ne.s32.totalorder %s134, %s136
      %p140 = scmp.eq.s32.totalorder %s23, 0
      %p141 = por %p139, %p140
      %p142 = scmp.ne.s32.totalorder %s134, %s136
      %p143 = scmp.eq.s32.totalorder %s28, 7
      %p144 = por %p142, %p143
      %p145 = scmp.ne.s32.totalorder %s136, %s137
      %p146 = scmp.eq.s32.totalorder %s28, 0
      %p147 = por %p145, %p146
      %p148 = scmp.ne.s32.totalorder %s136, %s137
      %p149 = scmp.eq.s32.totalorder %s29, 7
      %p150 = por %p148, %p149
      %p152 = scmp.ne.s32.totalorder %s137, %s151
      %p153 = scmp.eq.s32.totalorder %s29, 0
      %p154 = por %p152, %p153
      %s156 = sadd.s32 %s155, 1
      %p159 = scmp.eq.s32.totalorder %s23, 7
      %p160 = scmp.ne.s32.totalorder %s155, %s157
      %p161 = scmp.eq.s32.totalorder %s23, 0
      %p162 = por %p160, %p161
      %p163 = scmp.ne.s32.totalorder %s155, %s157
      %p164 = scmp.eq.s32.totalorder %s28, 7
      %p165 = por %p163, %p164
      %p166 = scmp.ne.s32.totalorder %s157, %s158
      %p167 = scmp.eq.s32.totalorder %s28, 0
      %p168 = por %p166, %p167
      %p169 = scmp.ne.s32.totalorder %s157, %s158
      %p170 = scmp.eq.s32.totalorder %s29, 7
      %p171 = por %p169, %p170
      %p173 = scmp.ne.s32.totalorder %s158, %s172
      %p174 = scmp.eq.s32.totalorder %s29, 0
      %p175 = por %p173, %p174
      %s177 = sadd.s32 %s176, 1
      %p180 = scmp.eq.s32.totalorder %s23, 7
      %p181 = scmp.ne.s32.totalorder %s176, %s178
      %p182 = scmp.eq.s32.totalorder %s23, 0
      %p183 = por %p181, %p182
      %p184 = scmp.ne.s32.totalorder %s176, %s178
      %p185 = scmp.eq.s32.totalorder %s28, 7
      %p186 = por %p184, %p185
      %p187 = scmp.ne.s32.totalorder %s178, %s179
      %p188 = scmp.eq.s32.totalorder %s28, 0
      %p189 = por %p187, %p188
      %p190 = scmp.ne.s32.totalorder %s178, %s179
      %p191 = scmp.eq.s32.totalorder %s29, 7
      %p192 = por %p190, %p191
      %p194 = scmp.ne.s32.totalorder %s179, %s193
      %p195 = scmp.eq.s32.totalorder %s29, 0
      %p196 = por %p194, %p195
      %s198 = sadd.s32 %s197, 1
      %p201 = scmp.eq.s32.totalorder %s23, 7
      %p202 = scmp.ne.s32.totalorder %s197, %s199
      %p203 = scmp.eq.s32.totalorder %s23, 0
      %p204 = por %p202, %p203
      %p205 = scmp.ne.s32.totalorder %s197, %s199
      %p206 = scmp.eq.s32.totalorder %s28, 7
      %p207 = por %p205, %p206
      %p208 = scmp.ne.s32.totalorder %s199, %s200
      %p209 = scmp.eq.s32.totalorder %s28, 0
      %p210 = por %p208, %p209
      %p211 = scmp.ne.s32.totalorder %s199, %s200
      %p212 = scmp.eq.s32.totalorder %s29, 7
      %p213 = por %p211, %p212
      %p215 = scmp.ne.s32.totalorder %s200, %s214
      %p216 = scmp.eq.s32.totalorder %s29, 0
      %p217 = por %p215, %p216
      %s219 = sadd.s32 %s218, 1
      %p222 = scmp.eq.s32.totalorder %s23, 7
      %p223 = scmp.ne.s32.totalorder %s218, %s220
      %p224 = scmp.eq.s32.totalorder %s23, 0
      %p225 = por %p223, %p224
      %p226 = scmp.ne.s32.totalorder %s218, %s220
      %p227 = scmp.eq.s32.totalorder %s28, 7
      %p228 = por %p226, %p227
      %p229 = scmp.ne.s32.totalorder %s220, %s221
      %p230 = scmp.eq.s32.totalorder %s28, 0
      %p231 = por %p229, %p230
      %p232 = scmp.ne.s32.totalorder %s220, %s221
      %p233 = scmp.eq.s32.totalorder %s29, 7
      %p234 = por %p232, %p233
      %p236 = scmp.ne.s32.totalorder %s221, %s235
      %p237 = scmp.eq.s32.totalorder %s29, 0
      %p238 = por %p236, %p237
      %s240 = sadd.s32 %s239, 1
      %p243 = scmp.eq.s32.totalorder %s23, 7
      %p244 = scmp.ne.s32.totalorder %s239, %s241
      %p245 = scmp.eq.s32.totalorder %s23, 0
      %p246 = por %p244, %p245
      %p247 = scmp.ne.s32.totalorder %s239, %s241
      %p248 = scmp.eq.s32.totalorder %s28, 7
      %p249 = por %p247, %p248
      %p250 = scmp.ne.s32.totalorder %s241, %s242
      %p251 = scmp.eq.s32.totalorder %s28, 0
      %p252 = por %p250, %p251
      %p253 = scmp.ne.s32.totalorder %s241, %s242
      %p254 = scmp.eq.s32.totalorder %s29, 7
      %p255 = por %p253, %p254
      %p257 = scmp.ne.s32.totalorder %s242, %s256
      %p258 = scmp.eq.s32.totalorder %s29, 0
      %p259 = por %p257, %p258
      %s260 = smul.u32 %s31, 2
      %s261 = sadd.s32 %s260, %s32
      %s262 = smul.u32 %s45, 2
      %s263 = sadd.s32 %s262, %s41
      %s264 = ssub.s32 %s30, %s49
      %s265 = ssub.s32 %s261, %s263
      %s266 = sor.u32 %s264, %s265
      %p267 = scmp.eq.s32.totalorder %s266, 0
      %s269 = sadd.s32 %s268, 1
      %s270 = scalar_select %p267, %s268, %s269
      %p273 = pneg %p267
      %p274 = scmp.eq.s32.totalorder %s23, 7
      %p275 = por %p273, %p274
      %p276 = scmp.ne.s32.totalorder %s268, %s271
      %p277 = scmp.eq.s32.totalorder %s23, 0
      %p278 = por %p276, %p277
      %p279 = scmp.ne.s32.totalorder %s268, %s271
      %p280 = scmp.eq.s32.totalorder %s28, 7
      %p281 = por %p279, %p280
      %p282 = scmp.ne.s32.totalorder %s271, %s272
      %p283 = scmp.eq.s32.totalorder %s28, 0
      %p284 = por %p282, %p283
      %p285 = scmp.ne.s32.totalorder %s271, %s272
      %p286 = scmp.eq.s32.totalorder %s29, 7
      %p287 = por %p285, %p286
      %p289 = scmp.ne.s32.totalorder %s272, %s288
      %p290 = scmp.eq.s32.totalorder %s29, 0
      %p291 = por %p289, %p290
      %s292 = smul.u32 %s31, 2
      %s293 = sadd.s32 %s292, %s32
      %s294 = smul.u32 %s45, 2
      %s295 = sadd.s32 %s294, %s41
      %s296 = ssub.s32 %s30, %s49
      %s297 = ssub.s32 %s293, %s295
      %s298 = sor.u32 %s296, %s297
      %p299 = scmp.eq.s32.totalorder %s298, 0
      %s301 = sadd.s32 %s300, 1
      %s302 = scalar_select %p299, %s300, %s301
      %p305 = pneg %p299
      %p306 = scmp.eq.s32.totalorder %s23, 7
      %p307 = por %p305, %p306
      %p308 = scmp.ne.s32.totalorder %s300, %s303
      %p309 = scmp.eq.s32.totalorder %s23, 0
      %p310 = por %p308, %p309
      %p311 = scmp.ne.s32.totalorder %s300, %s303
      %p312 = scmp.eq.s32.totalorder %s28, 7
      %p313 = por %p311, %p312
      %p314 = scmp.ne.s32.totalorder %s303, %s304
      %p315 = scmp.eq.s32.totalorder %s28, 0
      %p316 = por %p314, %p315
      %p317 = scmp.ne.s32.totalorder %s303, %s304
      %p318 = scmp.eq.s32.totalorder %s29, 7
      %p319 = por %p317, %p318
      %p321 = scmp.ne.s32.totalorder %s304, %s320
      %p322 = scmp.eq.s32.totalorder %s29, 0
      %p323 = por %p321, %p322
      %p324 = scmp.le.s32.totalorder 1, %s23
      %p325 = scmp.lt.s32.totalorder %s23, 9
      %p326 = pnand %p324, %p325
      %p327 = pneg %p326
      // Predicated region
      $region9: #{tpu_custom_call.1} parent=5 // pred_check
        _
      $region10: #{tpu_custom_call.1} parent=5 // pred_check_branch
        %329 = sbr.rel (%p326) target = $region12
      $region11: #{tpu_custom_call.1} parent=5 // pred_region
        %s330 = ssub.s32 %s23, 1
        // Predicated region
        $region13: #{tpu_custom_call.1} parent=11 // pred_check
          %p331 = pneg %p147
        $region14: #{tpu_custom_call.1} parent=11 // pred_check_branch
          %333 = sbr.rel (%p331) target = $region16
        $region15: #{tpu_custom_call.1} parent=11 // pred_region
          _
        $region16: #{tpu_custom_call.1} parent=11 // pred_fallthru
          _
        // Predicated region
        $region17: #{tpu_custom_call.1} parent=11 // pred_check
          %p334 = pneg %p168
        $region18: #{tpu_custom_call.1} parent=11 // pred_check_branch
          %336 = sbr.rel (%p334) target = $region20
        $region19: #{tpu_custom_call.1} parent=11 // pred_region
          _
        $region20: #{tpu_custom_call.1} parent=11 // pred_fallthru
          _
        // Predicated region
        $region21: #{tpu_custom_call.1} parent=11 // pred_check
          %p337 = pneg %p189
        $region22: #{tpu_custom_call.1} parent=11 // pred_check_branch
          %339 = sbr.rel (%p337) target = $region24
        $region23: #{tpu_custom_call.1} parent=11 // pred_region
          _
        $region24: #{tpu_custom_call.1} parent=11 // pred_fallthru
          _
        // Predicated region
        $region25: #{tpu_custom_call.1} parent=11 // pred_check
          %p340 = pneg %p210
        $region26: #{tpu_custom_call.1} parent=11 // pred_check_branch
          %342 = sbr.rel (%p340) target = $region28
        $region27: #{tpu_custom_call.1} parent=11 // pred_region
          _
        $region28: #{tpu_custom_call.1} parent=11 // pred_fallthru
          _
        // Predicated region
        $region29: #{tpu_custom_call.1} parent=11 // pred_check
          %p343 = pneg %p231
        $region30: #{tpu_custom_call.1} parent=11 // pred_check_branch
          %345 = sbr.rel (%p343) target = $region32
        $region31: #{tpu_custom_call.1} parent=11 // pred_region
          _
        $region32: #{tpu_custom_call.1} parent=11 // pred_fallthru
          _
        // Predicated region
        $region33: #{tpu_custom_call.1} parent=11 // pred_check
          %p346 = pneg %p252
        $region34: #{tpu_custom_call.1} parent=11 // pred_check_branch
          %348 = sbr.rel (%p346) target = $region36
        $region35: #{tpu_custom_call.1} parent=11 // pred_region
          _
        $region36: #{tpu_custom_call.1} parent=11 // pred_fallthru
          _
      $region12: #{tpu_custom_call.1} parent=5 // pred_fallthru
        _
      %p349 = scmp.lt.s32.totalorder %s23, 8
      // Predicated region
      $region37: #{tpu_custom_call.1} parent=5 // pred_check
        %p350 = pneg %p349
      $region38: #{tpu_custom_call.1} parent=5 // pred_check_branch
        %352 = sbr.rel (%p350) target = $region40
      $region39: #{tpu_custom_call.1} parent=5 // pred_region
        // Predicated region
        $region41: #{tpu_custom_call.1} parent=39 // pred_check
          %p353 = pneg %p68
        $region42: #{tpu_custom_call.1} parent=39 // pred_check_branch
          %355 = sbr.rel (%p353) target = $region44
        $region43: #{tpu_custom_call.1} parent=39 // pred_region
          %s356 = smul.u32 %s31, 2
          %s357 = sadd.s32 %s356, %s32
          %p358 = scmp.lt.s32.totalorder %s30, 1
          %s359 = scalar_select %p358, %s30, 1
          %p360 = scmp.lt.s32.totalorder %s357, 3
          %s361 = scalar_select %p360, %s357, 3
          %s362 = smul.addr %s359, 4
          %s363 = sadd.s32 %s361, %s362
          %s364 = smul.addr %s363, 4
          %s365 = scalar_lea.vmem %s0, %s364
          %s366 = smul.u32 %s31, 2
          %s367 = sadd.s32 %s366, %s32
        $region44: #{tpu_custom_call.1} parent=39 // pred_fallthru
          _
        // Predicated region
        $region45: #{tpu_custom_call.1} parent=39 // pred_check
          %p368 = pneg %p94
        $region46: #{tpu_custom_call.1} parent=39 // pred_check_branch
          %370 = sbr.rel (%p368) target = $region48
        $region47: #{tpu_custom_call.1} parent=39 // pred_region
          %p371 = scmp.lt.s32.totalorder %s30, 1
          %s372 = scalar_select %p371, %s30, 1
          %s373 = smul.addr %s372, 2
          %s374 = smul.addr %s373, 4
          %s375 = scalar_lea.vmem %s1, %s374
        $region48: #{tpu_custom_call.1} parent=39 // pred_fallthru
          _
        // Predicated region
        $region49: #{tpu_custom_call.1} parent=39 // pred_check
          %p376 = pneg %p120
        $region50: #{tpu_custom_call.1} parent=39 // pred_check_branch
          %378 = sbr.rel (%p376) target = $region52
        $region51: #{tpu_custom_call.1} parent=39 // pred_region
          %p379 = scmp.lt.s32.totalorder %s30, 1
          %s380 = scalar_select %p379, %s30, 1
          %s381 = smul.addr %s380, 2
          %s382 = smul.addr %s381, 4
          %s383 = scalar_lea.vmem %s2, %s382
        $region52: #{tpu_custom_call.1} parent=39 // pred_fallthru
          _
      $region40: #{tpu_custom_call.1} parent=5 // pred_fallthru
        _
      %p384 = scmp.le.s32.totalorder 1, %s23
      %p385 = scmp.lt.s32.totalorder %s23, 9
      %p386 = pnand %p384, %p385
      %p387 = pneg %p386
      // Predicated region
      $region53: #{tpu_custom_call.1} parent=5 // pred_check
        _
      $region54: #{tpu_custom_call.1} parent=5 // pred_check_branch
        %389 = sbr.rel (%p386) target = $region56
      $region55: #{tpu_custom_call.1} parent=5 // pred_region
        %s390 = ssub.s32 %s23, 1
        %s391 = smul.u32 %s34, 2
        %s392 = sadd.s32 %s391, %s35
        %p393 = scmp.lt.s32.totalorder %s33, 1
        %s394 = scalar_select %p393, %s33, 1
        %p395 = scmp.lt.s32.totalorder %s392, 3
        %s396 = scalar_select %p395, %s392, 3
        %s397 = smul.addr %s394, 4
        %s398 = sadd.s32 %s396, %s397
        %s399 = smul.addr %s398, 4
        %s400 = scalar_lea.vmem %s0, %s399
        %p401 = pneg %p74
        %p402 = pneg %p71
        %p403 = scmp.lt.s32.totalorder %s33, 1
        %s404 = scalar_select %p403, %s33, 1
        %s405 = smul.addr %s404, 2
        %s406 = smul.addr %s405, 4
        %s407 = scalar_lea.vmem %s1, %s406
        %p408 = pneg %p100
        %p409 = pneg %p97
        %p410 = scmp.lt.s32.totalorder %s33, 1
        %s411 = scalar_select %p410, %s33, 1
        %s412 = smul.addr %s411, 2
        %s413 = smul.addr %s412, 4
        %s414 = scalar_lea.vmem %s2, %s413
        %p415 = pneg %p126
        %p416 = pneg %p123
        %p417 = pneg %p147
        %p418 = pneg %p144
        %p419 = pneg %p168
        %p420 = pneg %p165
        %p421 = pneg %p189
        %p422 = pneg %p186
        %p423 = pneg %p210
        %p424 = pneg %p207
        %p425 = pneg %p231
        %p426 = pneg %p228
        %p427 = pneg %p252
        %p428 = pneg %p249
        %p429 = pneg %p284
        %p430 = pneg %p281
        %s431 = sand.u32 %s271, 1
        %s432 = scalar_lea.sflag [#allocation5], %s431
        %s433 = sand.u32 %s271, 1
        %s434 = smul.addr %s433, 8
        %s435 = scalar_lea.vmem [#allocation4], %s434
        %p436 = pneg %p316
        %p437 = pneg %p313
        %s438 = sand.u32 %s303, 1
        %s439 = scalar_lea.sflag [#allocation7], %s438
        %s440 = sand.u32 %s303, 1
        %s441 = smul.addr %s440, 8
        %s442 = scalar_lea.vmem [#allocation6], %s441
        %s443 = smul.u32 %s34, 2
        %s444 = sadd.s32 %s443, %s35
        %p445 = scmp.lt.s32.totalorder %s33, 1
        %s446 = scalar_select %p445, %s33, 1
        %p447 = scmp.lt.s32.totalorder %s444, 3
        %s448 = scalar_select %p447, %s444, 3
        %s449 = smul.addr %s446, 4
        %s450 = sadd.s32 %s448, %s449
        %s451 = smul.addr %s450, 4
        %s452 = scalar_lea.vmem %s0, %s451
        %s453 = smul.u32 %s34, 2
        %s454 = sadd.s32 %s453, %s35
        %p455 = scmp.lt.s32.totalorder %s33, 1
        %s456 = scalar_select %p455, %s33, 1
        %s457 = smul.addr %s456, 2
        %s458 = smul.addr %s457, 4
        %s459 = scalar_lea.vmem %s1, %s458
        %p460 = scmp.lt.s32.totalorder %s33, 1
        %s461 = scalar_select %p460, %s33, 1
        %s462 = smul.addr %s461, 2
        %s463 = smul.addr %s462, 4
        %s464 = scalar_lea.vmem %s2, %s463
        %s465 = smul.u32 %s34, 2
        %s466 = sadd.s32 %s465, %s35
        %s467 = smul.u32 %s34, 2
        %s468 = sadd.s32 %s467, %s35
        %p470 = scmp.eq.s32.totalorder %s35, 0
        // Predicated region
        $region57: #{tpu_custom_call.1} parent=55 // pred_check
          %p471 = pneg %p470
        $region58: #{tpu_custom_call.1} parent=55 // pred_check_branch
          %473 = sbr.rel (%p471) target = $region60
        $region59: #{tpu_custom_call.1} parent=55 // pred_region
          %v474 = vld [vmem:[%s459] sm:$0xf]
          %v475 = vld [vmem:[%s459 + $0x4] sm:$0xf]
          %v476 = vld [vmem:[%s464] sm:$0xf]
          %v477 = vld [vmem:[%s464 + $0x4] sm:$0xf]
          %v478 = vld [vmem:[%s4] sm:$0xf]
          %v479 = vld [vmem:[%s4 + $0x4] sm:$0xf]
          %v480 = vld [vmem:[%s4 + $0x8] sm:$0xf]
          %v481 = vld [vmem:[%s4 + $0xc] sm:$0xf]
          %v486 = vunpack.c.l.b16 %v478
          %v487 = vunpack.c.l.b16 %v479
          %v488 = vunpack.c.l.b16 %v480
          %v489 = vunpack.c.l.b16 %v481
          %v490 = vpack.c.b16 %v487, %v486
          %v491 = vpack.c.b16 %v489, %v488
          %v494 = vunpack.c.l.b16 %v474
          %v495 = vunpack.c.l.b16 %v475
          %v496 = vpack.c.b16 %v495, %v494
          %vm498 = vcmask 130048
          %v500 = vsel %vm498, %v490, 0
          %v503 = vsel %vm498, %v491, 0
          %505 = vmatpush.bf16.msra.mxu0 0
          %506 = vmatpush.bf16.msra.mxu0 0
          %507 = vmatpush.bf16.msra.mxu0 0
          %508 = vmatpush.bf16.msra.mxu0 0
          %509 = vmatpush.bf16.msra.mxu0 0
          %510 = vmatpush.bf16.msra.mxu0 0
          %511 = vmatpush.bf16.msra.mxu0 0
          %512 = vmatpush.bf16.msra.mxu0 %v496
          %513 = vmatmul.bf16.gmra.mxu0 %v500
          %v514 = vpop.f32.mrf.mxu0
          %v515 = vadd.f32 0.0, %v514
          %v516 = vpop.f32.mrf.mxu0
          %v517 = vadd.f32 0.0, %v516
          %518 = vmatmul.bf16.gmra.mxu0 %v503
          %v519 = vpop.f32.mrf.mxu0
          %v520 = vadd.f32 0.0, %v519
          %v521 = vpop.f32.mrf.mxu0
          %v522 = vadd.f32 0.0, %v521
          %523 = vdwg.mxu0
          %v524 = vld [vmem:[%s5] sm:$0xf]
          %v525 = vld [vmem:[%s5 + $0x4] sm:$0xf]
          %v526 = vld [vmem:[%s5 + $0x8] sm:$0xf]
          %v527 = vld [vmem:[%s5 + $0xc] sm:$0xf]
          %v532 = vunpack.c.l.b16 %v524
          %v533 = vunpack.c.l.b16 %v525
          %v534 = vunpack.c.l.b16 %v526
          %v535 = vunpack.c.l.b16 %v527
          %v536 = vpack.c.b16 %v533, %v532
          %v537 = vpack.c.b16 %v535, %v534
          %v540 = vunpack.c.l.b16 %v476
          %v541 = vunpack.c.l.b16 %v477
          %v542 = vpack.c.b16 %v541, %v540
          %v545 = vsel %vm498, %v536, 0
          %v548 = vsel %vm498, %v537, 0
          %550 = vmatpush.bf16.msra.mxu0 0
          %551 = vmatpush.bf16.msra.mxu0 0
          %552 = vmatpush.bf16.msra.mxu0 0
          %553 = vmatpush.bf16.msra.mxu0 0
          %554 = vmatpush.bf16.msra.mxu0 0
          %555 = vmatpush.bf16.msra.mxu0 0
          %556 = vmatpush.bf16.msra.mxu0 0
          %557 = vmatpush.bf16.msra.mxu0 %v542
          %558 = vmatmul.bf16.gmra.mxu0 %v545
          %v559 = vpop.f32.mrf.mxu0
          %v560 = vadd.f32 0.0, %v559
          %v561 = vpop.f32.mrf.mxu0
          %v562 = vadd.f32 0.0, %v561
          %563 = vmatmul.bf16.gmra.mxu0 %v548
          %v564 = vpop.f32.mrf.mxu0
          %v565 = vadd.f32 0.0, %v564
          %v566 = vpop.f32.mrf.mxu0
          %v567 = vadd.f32 0.0, %v566
          %568 = vdwg.mxu0
          %v569 = vpack.c.bf16 %v515, %v515
          %v570 = vpack.c.bf16 %v517, %v517
          %v571 = vpack.c.bf16 %v520, %v520
          %v572 = vpack.c.bf16 %v522, %v522
          %573 = vst [vmem:[#allocation2] sm:$0xf] %v569
          %574 = vst [vmem:[#allocation2 + $0x4] sm:$0xf] %v570
          %575 = vst [vmem:[#allocation2 + $0x8] sm:$0xf] %v571
          %576 = vst [vmem:[#allocation2 + $0xc] sm:$0xf] %v572
          %v577 = vpack.c.bf16 %v560, %v560
          %v578 = vpack.c.bf16 %v562, %v562
          %v579 = vpack.c.bf16 %v565, %v565
          %v580 = vpack.c.bf16 %v567, %v567
          %581 = vst [vmem:[#allocation3] sm:$0xf] %v577
          %582 = vst [vmem:[#allocation3 + $0x4] sm:$0xf] %v578
          %583 = vst [vmem:[#allocation3 + $0x8] sm:$0xf] %v579
          %584 = vst [vmem:[#allocation3 + $0xc] sm:$0xf] %v580
        $region60: #{tpu_custom_call.1} parent=55 // pred_fallthru
          _
        %v585 = vld [vmem:[%s452] sm:$0xf]
        %v586 = vld [vmem:[%s3] sm:$0xf]
        %v587 = vld [vmem:[%s3 + $0x4] sm:$0xf]
        %v590 = vunpack.c.l.b16 %v586
        %v591 = vunpack.c.l.b16 %v587
        %v592 = vpack.c.b16 %v591, %v590
        %vm594 = vcmask 130048
        %v596 = vsel %vm594, %v585, 0
        %598 = vmatpush.bf16.msra.mxu0 0
        %599 = vmatpush.bf16.msra.mxu0 0
        %600 = vmatpush.bf16.msra.mxu0 0
        %601 = vmatpush.bf16.msra.mxu0 0
        %602 = vmatpush.bf16.msra.mxu0 0
        %603 = vmatpush.bf16.msra.mxu0 0
        %604 = vmatpush.bf16.msra.mxu0 0
        %605 = vmatpush.bf16.msra.mxu0 %v592
        %606 = vmatmul.bf16.gmra.mxu0 %v596
        %v607 = vpop.f32.mrf.mxu0
        %v608 = vadd.f32 0.0, %v607
        %v609 = vpop.f32.mrf.mxu0
        %610 = vdwg.mxu0
        %612 = vrot.lane.b32.xlu0 %v608, 120
        %v613 = vpop.permute.xlu0 %612
        %615 = vrot.lane.b32.xlu0 %v608, 112
        %v616 = vpop.permute.xlu0 %615
        %618 = vrot.lane.b32.xlu0 %v608, 104
        %v619 = vpop.permute.xlu0 %618
        %v621 = vrot.slane %v616, 4
        %vm622 = vcmask 1047556
        %v623 = vsel %vm622, %v621, %v608
        %v624 = vrot.slane %v608, 4
        %v625 = vsel %vm622, %v616, %v624
        %v627 = vunpack.c.l.s4 1983009808
        %v628 = vunpack.c.0.s8 %v627
        %v629 = vperm.slane %v623, %v628
        %v631 = vunpack.c.l.s4 1983009808
        %v632 = vunpack.c.0.s8 %v631
        %v633 = vperm.slane %v625, %v632
        %v634 = vrot.slane %v619, 4
        %v635 = vsel %vm622, %v634, %v613
        %v636 = vrot.slane %v613, 4
        %v637 = vsel %vm622, %v619, %v636
        %v639 = vunpack.c.l.s4 1983009808
        %v640 = vunpack.c.0.s8 %v639
        %v641 = vperm.slane %v635, %v640
        %v643 = vunpack.c.l.s4 1983009808
        %v644 = vunpack.c.0.s8 %v643
        %v645 = vperm.slane %v637, %v644
        %v646 = vrot.slane %v641, 4
        %v647 = vsel %vm622, %v646, %v629
        %v648 = vrot.slane %v629, 4
        %v649 = vsel %vm622, %v641, %v648
        %v651 = vunpack.c.l.s4 1934713408
        %v652 = vunpack.c.0.s8 %v651
        %v653 = vperm.slane %v647, %v652
        %v655 = vunpack.c.l.s4 1934713408
        %v656 = vunpack.c.0.s8 %v655
        %v657 = vperm.slane %v649, %v656
        %v658 = vrot.slane %v645, 4
        %v659 = vsel %vm622, %v658, %v633
        %v660 = vrot.slane %v633, 4
        %v661 = vsel %vm622, %v645, %v660
        %v663 = vunpack.c.l.s4 1934713408
        %v664 = vunpack.c.0.s8 %v663
        %v665 = vperm.slane %v659, %v664
        %v667 = vunpack.c.l.s4 1934713408
        %v668 = vunpack.c.0.s8 %v667
        %v669 = vperm.slane %v661, %v668
        %v670 = vrot.slane %v653, 4
        %v671 = vsel %vm622, 0.0, %v670
        %v672 = vrot.slane %v657, 4
        %v673 = vsel %vm622, 0.0, %v672
        %v674 = vrot.slane %v665, 4
        %v675 = vsel %vm622, 0.0, %v674
        %v676 = vrot.slane %v669, 4
        %v677 = vsel %vm622, 0.0, %v676
        %v678 = vsel %vm622, %v672, %v653
        %v680 = vunpack.c.l.s4 1983009808
        %v681 = vunpack.c.0.s8 %v680
        %v682 = vperm.slane %v678, %v681
        %v683 = vrot.slane %v673, 4
        %v684 = vsel %vm622, %v683, %v671
        %v686 = vunpack.c.l.s4 1983009808
        %v687 = vunpack.c.0.s8 %v686
        %v688 = vperm.slane %v684, %v687
        %v689 = vsel %vm622, %v676, %v665
        %v691 = vunpack.c.l.s4 1983009808
        %v692 = vunpack.c.0.s8 %v691
        %v693 = vperm.slane %v689, %v692
        %v694 = vrot.slane %v677, 4
        %v695 = vsel %vm622, %v694, %v675
        %v697 = vunpack.c.l.s4 1983009808
        %v698 = vunpack.c.0.s8 %v697
        %v699 = vperm.slane %v695, %v698
        %v700 = vrot.slane %v688, 4
        %v701 = vsel %vm622, %v700, %v682
        %v702 = vrot.slane %v682, 4
        %v703 = vsel %vm622, %v688, %v702
        %v705 = vunpack.c.l.s4 1934713408
        %v706 = vunpack.c.0.s8 %v705
        %v707 = vperm.slane %v701, %v706
        %v709 = vunpack.c.l.s4 1934713408
        %v710 = vunpack.c.0.s8 %v709
        %v711 = vperm.slane %v703, %v710
        %v712 = vrot.slane %v699, 4
        %v713 = vsel %vm622, %v712, %v693
        %v714 = vrot.slane %v693, 4
        %v715 = vsel %vm622, %v699, %v714
        %v717 = vunpack.c.l.s4 1934713408
        %v718 = vunpack.c.0.s8 %v717
        %v719 = vperm.slane %v713, %v718
        %v721 = vunpack.c.l.s4 1934713408
        %v722 = vunpack.c.0.s8 %v721
        %v723 = vperm.slane %v715, %v722
        %v724 = vrot.slane %v719, 4
        %v725 = vsel %vm622, %v724, %v707
        %v726 = vrot.slane %v707, 4
        %v727 = vsel %vm622, %v719, %v726
        %v728 = vrot.slane %v723, 4
        %v729 = vsel %vm622, %v728, %v711
        %v730 = vrot.slane %v711, 4
        %v731 = vsel %vm622, %v723, %v730
        %v732 = vpack.c.bf16 %v725, %v725
        %v733 = vpack.c.bf16 %v727, %v727
        %v734 = vpack.c.bf16 %v729, %v729
        %v735 = vpack.c.bf16 %v731, %v731
        %v736 = vld [vmem:[#allocation2] sm:$0xf]
        %v737 = vld [vmem:[#allocation2 + $0x4] sm:$0xf]
        %v738 = vld [vmem:[#allocation2 + $0x8] sm:$0xf]
        %v739 = vld [vmem:[#allocation2 + $0xc] sm:$0xf]
        %v740 = vld [vmem:[#allocation3] sm:$0xf]
        %v741 = vld [vmem:[#allocation3 + $0x4] sm:$0xf]
        %v742 = vld [vmem:[#allocation3 + $0x8] sm:$0xf]
        %v743 = vld [vmem:[#allocation3 + $0xc] sm:$0xf]
        %v744 = vld [vmem:[%s8] sm:$0x1]
        %v746 = vperm.slane %v744, 0
        %vm748 = vcmask 64512
        %v750 = vsel %vm748, %v732, 0
        %vm752 = vcmask 1043456
        %v754 = vsel %vm752, %v736, 0
        %756 = vmatpush.bf16.msra.mxu0 0
        %757 = vmatpush.bf16.msra.mxu0 0
        %758 = vmatpush.bf16.msra.mxu0 0
        %759 = vmatpush.bf16.msra.mxu0 0
        %760 = vmatpush.bf16.msra.mxu0 0
        %761 = vmatpush.bf16.msra.mxu0 0
        %762 = vmatpush.bf16.msra.mxu0 0
        %763 = vmatpush.bf16.msra.mxu0 %v754
        %764 = vmatmul.bf16.gmra.mxu0 %v750
        %v765 = vpop.f32.mrf.mxu0
        %v766 = vadd.f32 %v746, %v765
        %v767 = vpop.f32.mrf.mxu0
        %768 = vdwg.mxu0
        %v770 = vsel %vm748, %v733, 0
        %v773 = vsel %vm752, %v737, 0
        %775 = vmatpush.bf16.msra.mxu0 0
        %776 = vmatpush.bf16.msra.mxu0 0
        %777 = vmatpush.bf16.msra.mxu0 0
        %778 = vmatpush.bf16.msra.mxu0 0
        %779 = vmatpush.bf16.msra.mxu0 0
        %780 = vmatpush.bf16.msra.mxu0 0
        %781 = vmatpush.bf16.msra.mxu0 0
        %782 = vmatpush.bf16.msra.mxu0 %v773
        %783 = vmatmul.bf16.gmra.mxu0 %v770
        %v784 = vpop.f32.mrf.mxu0
        %v785 = vadd.f32 %v746, %v784
        %v786 = vpop.f32.mrf.mxu0
        %787 = vdwg.mxu0
        %v789 = vsel %vm748, %v734, 0
        %v792 = vsel %vm752, %v738, 0
        %794 = vmatpush.bf16.msra.mxu0 0
        %795 = vmatpush.bf16.msra.mxu0 0
        %796 = vmatpush.bf16.msra.mxu0 0
        %797 = vmatpush.bf16.msra.mxu0 0
        %798 = vmatpush.bf16.msra.mxu0 0
        %799 = vmatpush.bf16.msra.mxu0 0
        %800 = vmatpush.bf16.msra.mxu0 0
        %801 = vmatpush.bf16.msra.mxu0 %v792
        %802 = vmatmul.bf16.gmra.mxu0 %v789
        %v803 = vpop.f32.mrf.mxu0
        %v804 = vadd.f32 %v746, %v803
        %v805 = vpop.f32.mrf.mxu0
        %806 = vdwg.mxu0
        %v808 = vsel %vm748, %v735, 0
        %v811 = vsel %vm752, %v739, 0
        %813 = vmatpush.bf16.msra.mxu0 0
        %814 = vmatpush.bf16.msra.mxu0 0
        %815 = vmatpush.bf16.msra.mxu0 0
        %816 = vmatpush.bf16.msra.mxu0 0
        %817 = vmatpush.bf16.msra.mxu0 0
        %818 = vmatpush.bf16.msra.mxu0 0
        %819 = vmatpush.bf16.msra.mxu0 0
        %820 = vmatpush.bf16.msra.mxu0 %v811
        %821 = vmatmul.bf16.gmra.mxu0 %v808
        %v822 = vpop.f32.mrf.mxu0
        %v823 = vadd.f32 %v746, %v822
        %v824 = vpop.f32.mrf.mxu0
        %825 = vdwg.mxu0
        %826 = vmax.xlane.f32.xlu0 %v766
        %v827 = vpop.xlane.xlu0 %826
        %828 = vmax.xlane.f32.xlu0 %v785
        %v829 = vpop.xlane.xlu0 %828
        %830 = vmax.xlane.f32.xlu0 %v804
        %v831 = vpop.xlane.xlu0 %830
        %832 = vmax.xlane.f32.xlu0 %v823
        %v833 = vpop.xlane.xlu0 %832
        %v834 = vsub.f32 %v766, %v827
        %v835 = vsub.f32 %v785, %v829
        %v836 = vsub.f32 %v804, %v831
        %v837 = vsub.f32 %v823, %v833
        %v838 = vmul.f32 %v834, 1.442695
        %v839 = vpow.pop %v838
        %v840 = vmul.f32 %v835, 1.442695
        %v841 = vpow.pop %v840
        %v842 = vmul.f32 %v836, 1.442695
        %v843 = vpow.pop %v842
        %v844 = vmul.f32 %v837, 1.442695
        %v845 = vpow.pop %v844
        %846 = vadd.xlane.f32.xlu0 %v839
        %v847 = vpop.xlane.xlu0 %846
        %848 = vadd.xlane.f32.xlu0 %v841
        %v849 = vpop.xlane.xlu0 %848
        %850 = vadd.xlane.f32.xlu0 %v843
        %v851 = vpop.xlane.xlu0 %850
        %852 = vadd.xlane.f32.xlu0 %v845
        %v853 = vpop.xlane.xlu0 %852
        %v854 = vrcp.pop %v847
        %v855 = vrcp.pop %v849
        %v856 = vrcp.pop %v851
        %v857 = vrcp.pop %v853
        %v858 = vmul.f32 %v839, %v854
        %v859 = vmul.f32 %v841, %v855
        %v860 = vmul.f32 %v843, %v856
        %v861 = vmul.f32 %v845, %v857
        %v862 = vpack.c.bf16 %v858, %v858
        %v863 = vpack.c.bf16 %v859, %v859
        %v864 = vpack.c.bf16 %v860, %v860
        %v865 = vpack.c.bf16 %v861, %v861
        %866 = vmatpush.bf16.xpose.msra.mxu0 0
        %867 = vmatpush.bf16.xpose.msra.mxu0 0
        %868 = vmatpush.bf16.xpose.msra.mxu0 0
        %869 = vmatpush.bf16.xpose.msra.mxu0 0
        %870 = vmatpush.bf16.xpose.msra.mxu0 0
        %871 = vmatpush.bf16.xpose.msra.mxu0 0
        %872 = vmatpush.bf16.xpose.msra.mxu0 0
        %873 = vmatpush.bf16.xpose.msra.mxu0 %v740
        %874 = vmatmul.bf16.gmra.mxu0 %v862
        %v875 = vpop.f32.mrf.mxu0
        %v876 = vadd.f32 0.0, %v875
        %v877 = vpop.f32.mrf.mxu0
        %878 = vdwg.mxu0
        %879 = vmatpush.bf16.xpose.msra.mxu0 0
        %880 = vmatpush.bf16.xpose.msra.mxu0 0
        %881 = vmatpush.bf16.xpose.msra.mxu0 0
        %882 = vmatpush.bf16.xpose.msra.mxu0 0
        %883 = vmatpush.bf16.xpose.msra.mxu0 0
        %884 = vmatpush.bf16.xpose.msra.mxu0 0
        %885 = vmatpush.bf16.xpose.msra.mxu0 0
        %886 = vmatpush.bf16.xpose.msra.mxu0 %v741
        %887 = vmatmul.bf16.gmra.mxu0 %v863
        %v888 = vpop.f32.mrf.mxu0
        %v889 = vadd.f32 0.0, %v888
        %v890 = vpop.f32.mrf.mxu0
        %891 = vdwg.mxu0
        %892 = vmatpush.bf16.xpose.msra.mxu0 0
        %893 = vmatpush.bf16.xpose.msra.mxu0 0
        %894 = vmatpush.bf16.xpose.msra.mxu0 0
        %895 = vmatpush.bf16.xpose.msra.mxu0 0
        %896 = vmatpush.bf16.xpose.msra.mxu0 0
        %897 = vmatpush.bf16.xpose.msra.mxu0 0
        %898 = vmatpush.bf16.xpose.msra.mxu0 0
        %899 = vmatpush.bf16.xpose.msra.mxu0 %v742
        %900 = vmatmul.bf16.gmra.mxu0 %v864
        %v901 = vpop.f32.mrf.mxu0
        %v902 = vadd.f32 0.0, %v901
        %v903 = vpop.f32.mrf.mxu0
        %904 = vdwg.mxu0
        %905 = vmatpush.bf16.xpose.msra.mxu0 0
        %906 = vmatpush.bf16.xpose.msra.mxu0 0
        %907 = vmatpush.bf16.xpose.msra.mxu0 0
        %908 = vmatpush.bf16.xpose.msra.mxu0 0
        %909 = vmatpush.bf16.xpose.msra.mxu0 0
        %910 = vmatpush.bf16.xpose.msra.mxu0 0
        %911 = vmatpush.bf16.xpose.msra.mxu0 0
        %912 = vmatpush.bf16.xpose.msra.mxu0 %v743
        %913 = vmatmul.bf16.gmra.mxu0 %v865
        %v914 = vpop.f32.mrf.mxu0
        %v915 = vadd.f32 0.0, %v914
        %v916 = vpop.f32.mrf.mxu0
        %917 = vdwg.mxu0
        %v918 = vrot.slane %v902, 4
        %v919 = vsel %vm622, %v918, %v876
        %v920 = vrot.slane %v876, 4
        %v921 = vsel %vm622, %v902, %v920
        %v923 = vunpack.c.l.s4 1983009808
        %v924 = vunpack.c.0.s8 %v923
        %v925 = vperm.slane %v919, %v924
        %v927 = vunpack.c.l.s4 1983009808
        %v928 = vunpack.c.0.s8 %v927
        %v929 = vperm.slane %v921, %v928
        %v930 = vrot.slane %v915, 4
        %v931 = vsel %vm622, %v930, %v889
        %v932 = vrot.slane %v889, 4
        %v933 = vsel %vm622, %v915, %v932
        %v935 = vunpack.c.l.s4 1983009808
        %v936 = vunpack.c.0.s8 %v935
        %v937 = vperm.slane %v931, %v936
        %v939 = vunpack.c.l.s4 1983009808
        %v940 = vunpack.c.0.s8 %v939
        %v941 = vperm.slane %v933, %v940
        %v942 = vrot.slane %v937, 4
        %v943 = vsel %vm622, %v942, %v925
        %v944 = vrot.slane %v925, 4
        %v945 = vsel %vm622, %v937, %v944
        %v947 = vunpack.c.l.s4 1934713408
        %v948 = vunpack.c.0.s8 %v947
        %v949 = vperm.slane %v943, %v948
        %v951 = vunpack.c.l.s4 1934713408
        %v952 = vunpack.c.0.s8 %v951
        %v953 = vperm.slane %v945, %v952
        %v954 = vrot.slane %v941, 4
        %v955 = vsel %vm622, %v954, %v929
        %v956 = vrot.slane %v929, 4
        %v957 = vsel %vm622, %v941, %v956
        %v959 = vunpack.c.l.s4 1934713408
        %v960 = vunpack.c.0.s8 %v959
        %v961 = vperm.slane %v955, %v960
        %v963 = vunpack.c.l.s4 1934713408
        %v964 = vunpack.c.0.s8 %v963
        %v965 = vperm.slane %v957, %v964
        %v966 = vrot.slane %v949, 4
        %v967 = vsel %vm622, 0.0, %v966
        %v968 = vrot.slane %v953, 4
        %v969 = vsel %vm622, 0.0, %v968
        %v970 = vrot.slane %v961, 4
        %v971 = vsel %vm622, 0.0, %v970
        %v972 = vrot.slane %v965, 4
        %v973 = vsel %vm622, 0.0, %v972
        %v974 = vsel %vm622, %v968, %v949
        %v976 = vunpack.c.l.s4 1983009808
        %v977 = vunpack.c.0.s8 %v976
        %v978 = vperm.slane %v974, %v977
        %v979 = vrot.slane %v969, 4
        %v980 = vsel %vm622, %v979, %v967
        %v982 = vunpack.c.l.s4 1983009808
        %v983 = vunpack.c.0.s8 %v982
        %v984 = vperm.slane %v980, %v983
        %v985 = vsel %vm622, %v972, %v961
        %v987 = vunpack.c.l.s4 1983009808
        %v988 = vunpack.c.0.s8 %v987
        %v989 = vperm.slane %v985, %v988
        %v990 = vrot.slane %v973, 4
        %v991 = vsel %vm622, %v990, %v971
        %v993 = vunpack.c.l.s4 1983009808
        %v994 = vunpack.c.0.s8 %v993
        %v995 = vperm.slane %v991, %v994
        %v996 = vrot.slane %v984, 4
        %v997 = vsel %vm622, %v996, %v978
        %v998 = vrot.slane %v978, 4
        %v999 = vsel %vm622, %v984, %v998
        %v1001 = vunpack.c.l.s4 1934713408
        %v1002 = vunpack.c.0.s8 %v1001
        %v1003 = vperm.slane %v997, %v1002
        %v1005 = vunpack.c.l.s4 1934713408
        %v1006 = vunpack.c.0.s8 %v1005
        %v1007 = vperm.slane %v999, %v1006
        %v1008 = vrot.slane %v995, 4
        %v1009 = vsel %vm622, %v1008, %v989
        %v1010 = vrot.slane %v989, 4
        %v1011 = vsel %vm622, %v995, %v1010
        %v1013 = vunpack.c.l.s4 1934713408
        %v1014 = vunpack.c.0.s8 %v1013
        %v1015 = vperm.slane %v1009, %v1014
        %v1017 = vunpack.c.l.s4 1934713408
        %v1018 = vunpack.c.0.s8 %v1017
        %v1019 = vperm.slane %v1011, %v1018
        %v1020 = vrot.slane %v1015, 4
        %v1021 = vsel %vm622, %v1020, %v1003
        %v1022 = vrot.slane %v1003, 4
        %v1023 = vsel %vm622, %v1015, %v1022
        %v1024 = vrot.slane %v1019, 4
        %v1025 = vsel %vm622, %v1024, %v1007
        %v1026 = vrot.slane %v1007, 4
        %v1027 = vsel %vm622, %v1019, %v1026
        %1029 = vrot.lane.b32.xlu0 %v1023, 8
        %v1030 = vpop.permute.xlu0 %1029
        %1033 = vrot.lane.b32.xlu0 %v1025, 16
        %v1034 = vpop.permute.xlu0 %1033
        %1037 = vrot.lane.b32.xlu0 %v1027, 24
        %v1038 = vpop.permute.xlu0 %1037
        %v1040 = vsel %vm748, %v1021, %v1030
        %v1041 = vsel %vm594, %v1040, %v1034
        %vm1042 = vcmask 195584
        %v1043 = vsel %vm1042, %v1041, %v1038
        %v1044 = vpack.c.bf16 %v1043, %v1043
        %v1045 = vld [vmem:[%s6] sm:$0xf]
        %v1046 = vld [vmem:[%s6 + $0x4] sm:$0xf]
        %v1047 = vld [vmem:[%s6 + $0x8] sm:$0xf]
        %v1048 = vld [vmem:[%s6 + $0xc] sm:$0xf]
        %v1049 = vld [vmem:[%s7] sm:$0x1]
        %v1051 = vperm.slane %v1049, 0
        %v1057 = vunpack.c.l.b16 %v1045
        %v1058 = vunpack.c.l.b16 %v1046
        %v1059 = vunpack.c.l.b16 %v1047
        %v1060 = vunpack.c.l.b16 %v1048
        %v1061 = vpack.c.b16 %v1058, %v1057
        %v1062 = vpack.c.b16 %v1060, %v1059
        %vm1065 = vcmask 261120
        %v1067 = vsel %vm1065, %v1044, 0
        %1069 = vmatpush.bf16.msra.mxu0 0
        %1070 = vmatpush.bf16.msra.mxu0 0
        %1071 = vmatpush.bf16.msra.mxu0 0
        %1072 = vmatpush.bf16.msra.mxu0 0
        %1073 = vmatpush.bf16.msra.mxu0 0
        %1074 = vmatpush.bf16.msra.mxu0 0
        %1075 = vmatpush.bf16.msra.mxu0 %v1062
        %1076 = vmatpush.bf16.msra.mxu0 %v1061
        %1077 = vmatmul.bf16.gmra.mxu0 %v1067
        %v1078 = vpop.f32.mrf.mxu0
        %v1079 = vadd.f32 %v1051, %v1078
        %v1080 = vpop.f32.mrf.mxu0
        %1081 = vdwg.mxu0
        %1082 = vst [vmem:[%s435] sm:$0xff] %v1079
        %v1083 = vadd.f32 %v858, %v859
        %v1084 = vadd.f32 %v1083, %v860
        %v1085 = vadd.f32 %v1084, %v861
        %v1086 = vmul.f32 %v1085, 0.25
        %1087 = vst [vmem:[%s442] sm:$0xff] %v1086
        %s1088 = sand.u32 %s271, 1
        %s1089 = scalar_lea.sflag [#allocation5], %s1088
        %s1090 = sand.u32 %s271, 1
        %s1091 = smul.addr %s1090, 8
        %s1092 = scalar_lea.vmem [#allocation4], %s1091
        %s1093 = sand.u32 %s303, 1
        %s1094 = scalar_lea.sflag [#allocation7], %s1093
        %s1095 = sand.u32 %s303, 1
        %s1096 = smul.addr %s1095, 8
        %s1097 = scalar_lea.vmem [#allocation6], %s1096
        // Predicated region
        $region61: #{tpu_custom_call.1} parent=55 // pred_check
          %p1098 = pneg %p281
        $region62: #{tpu_custom_call.1} parent=55 // pred_check_branch
          %1100 = sbr.rel (%p1098) target = $region64
        $region63: #{tpu_custom_call.1} parent=55 // pred_region
          %s1101 = smul.u32 %s34, 2
          %s1102 = sadd.s32 %s1101, %s35
          %1104 = vsyncadd %s1089, 0
          %s1105 = smul.addr %s33, 4
          %s1106 = sadd.s32 %s1102, %s1105
          %s1107 = smul.addr %s1106, 8
          %s1108 = scalar_lea.hbm %s9, %s1107
          %s1110 = sshll.u32 %s1092, 4
          %s1111 = int_to_ptr.vmem [resolvable:$true] %s1110
          %s1112 = sshll.u32 %s1108, 4
          %s1113 = int_to_ptr.hbm [resolvable:$true] %s1112
          %1115 = dma.vmem_to_hbm [thread:$0]  %s1111, 128, %s1113, %s1089
        $region64: #{tpu_custom_call.1} parent=55 // pred_fallthru
          _
        // Predicated region
        $region65: #{tpu_custom_call.1} parent=55 // pred_check
          %p1116 = pneg %p313
        $region66: #{tpu_custom_call.1} parent=55 // pred_check_branch
          %1118 = sbr.rel (%p1116) target = $region68
        $region67: #{tpu_custom_call.1} parent=55 // pred_region
          %s1119 = smul.u32 %s34, 2
          %s1120 = sadd.s32 %s1119, %s35
          %1122 = vsyncadd %s1094, 0
          %s1123 = smul.addr %s33, 4
          %s1124 = sadd.s32 %s1120, %s1123
          %s1125 = smul.addr %s1124, 8
          %s1126 = scalar_lea.hbm %s10, %s1125
          %s1128 = sshll.u32 %s1097, 4
          %s1129 = int_to_ptr.vmem [resolvable:$true] %s1128
          %s1130 = sshll.u32 %s1126, 4
          %s1131 = int_to_ptr.hbm [resolvable:$true] %s1130
          %1133 = dma.vmem_to_hbm [thread:$0]  %s1129, 128, %s1131, %s1094
        $region68: #{tpu_custom_call.1} parent=55 // pred_fallthru
          _
      $region56: #{tpu_custom_call.1} parent=5 // pred_fallthru
        _
      %p1134 = scmp.le.s32.totalorder 2, %s23
      // Predicated region
      $region69: #{tpu_custom_call.1} parent=5 // pred_check
        %p1135 = pneg %p1134
      $region70: #{tpu_custom_call.1} parent=5 // pred_check_branch
        %1137 = sbr.rel (%p1135) target = $region72
      $region71: #{tpu_custom_call.1} parent=5 // pred_region
        %s1138 = ssub.s32 %s23, 2
        // Predicated region
        $region73: #{tpu_custom_call.1} parent=71 // pred_check
          %p1139 = pneg %p287
        $region74: #{tpu_custom_call.1} parent=71 // pred_check_branch
          %1141 = sbr.rel (%p1139) target = $region76
        $region75: #{tpu_custom_call.1} parent=71 // pred_region
          %s1142 = sand.u32 %s272, 1
          %s1143 = scalar_lea.sflag [#allocation5], %s1142
          %s1144 = sand.u32 %s272, 1
          %s1145 = smul.addr %s1144, 8
          %s1146 = scalar_lea.vmem [#allocation4], %s1145
          %1148 = dma.done %s1143, 128
        $region76: #{tpu_custom_call.1} parent=71 // pred_fallthru
          _
        // Predicated region
        $region77: #{tpu_custom_call.1} parent=71 // pred_check
          %p1149 = pneg %p319
        $region78: #{tpu_custom_call.1} parent=71 // pred_check_branch
          %1151 = sbr.rel (%p1149) target = $region80
        $region79: #{tpu_custom_call.1} parent=71 // pred_region
          %s1152 = sand.u32 %s304, 1
          %s1153 = scalar_lea.sflag [#allocation7], %s1152
          %s1154 = sand.u32 %s304, 1
          %s1155 = smul.addr %s1154, 8
          %s1156 = scalar_lea.vmem [#allocation6], %s1155
          %1158 = dma.done %s1153, 128
        $region80: #{tpu_custom_call.1} parent=71 // pred_fallthru
          _
      $region72: #{tpu_custom_call.1} parent=5 // pred_fallthru
        _
    $region6: #{tpu_custom_call.1} parent=1 // loop_footer
      %s27 = sadd.s32 1, %s23
    $region7: #{tpu_custom_call.1} parent=1 // loop_footer_branch
      %22 = sbr.rel target = $region3
    $region8: #{tpu_custom_call.1} parent=1 // loop_exit
      _
    %1159 = vsyncpa [#allocation5], 1
    %s1160 = scalar_lea.sflag [#allocation5], 1
    %1161 = vsyncpa %s1160, 1
    %1162 = vsyncpa [#allocation7], 1
    %s1163 = scalar_lea.sflag [#allocation7], 1
    %1164 = vsyncpa %s1163, 1

</llo_original>
